<compile_context>
chip_gen: v6e
topology: v6e:2x2x1
jax: 0.10.0
libtpu: 0.0.40
codegen_flags: <defaults>
</compile_context>

<pallas_src>
import functools

import jax
import jax.numpy as jnp
import numpy as np
from jax import lax
from jax.experimental import pallas as pl
from jax.experimental.pallas import tpu as pltpu


def _vmem_limit_bytes():
    # 32 MiB is safe on every generation; on 128-MiB-VMEM parts (v5e/v6e) take a larger
    # scoped budget so the linear kernel can use wider tiles (fewer redundant weight reads).
    cap = 64 << 20
    try:
        cap = int(getattr(pltpu.get_tpu_info(), "vmem_capacity_bytes", cap))
    except Exception:
        pass
    return max(32 << 20, min(cap // 2, 96 << 20))


_VMEM_LIMIT = _vmem_limit_bytes()


def _round_up(v, m):
    return (v + m - 1) // m * m


# ----------------------------- linear projection ---------------------------- #

def _linear_kernel(x_ref, w_ref, b_ref, o_ref, acc_ref, *, use_bf16):
    # x: (tm, tk), w: (tk, tn) (weight pre-transposed), b: (1, tn), o: (tm, tn)
    @pl.when(pl.program_id(2) == 0)
    def _init():
        acc_ref[...] = jnp.zeros_like(acc_ref)

    x = x_ref[...]
    w = w_ref[...]
    if use_bf16:
        # bf16 operands -> 2-4x MXU rate on v6e/v7x; f32 accumulation keeps accuracy.
        x = x.astype(jnp.bfloat16)
        w = w.astype(jnp.bfloat16)
    acc_ref[...] += jnp.dot(x, w, preferred_element_type=jnp.float32)

    @pl.when(pl.program_id(2) == pl.num_programs(2) - 1)
    def _finalize():
        o_ref[...] = (acc_ref[...] + b_ref[...].astype(jnp.float32)).astype(o_ref.dtype)


def linear_pallas(x2d, w_t, b, *, use_bf16=True):
    """y = x2d @ w_t + b.  w_t is (in, out) -- the torch weight pre-transposed once at
    parameter-creation time (no per-forward .T / weight copy in HBM)."""
    M, K = x2d.shape
    K2, N = w_t.shape
    assert K == K2

    tm_cap = 512
    tn_cap = 1024 if _VMEM_LIMIT >= (64 << 20) else 512   # wider tiles on 128-MiB parts
    tk_cap = 512

    # Tile = full extent when it fits (block == array dims is always legal), else a
    # 128/512-aligned cap with zero padding (keeps MXU-friendly, bounds VMEM on v7x).
    tm, Mp = (M, M) if M <= tm_cap else (tm_cap, _round_up(M, tm_cap))
    tn, Np = (N, N) if N <= tn_cap else (tn_cap, _round_up(N, tn_cap))
    tk, Kp = (K, K) if K <= tk_cap else (tk_cap, _round_up(K, tk_cap))

    xp = x2d if (Mp, Kp) == (M, K) else jnp.pad(x2d, ((0, Mp - M), (0, Kp - K)))
    wp = w_t if (Kp, Np) == (K, N) else jnp.pad(w_t, ((0, Kp - K), (0, Np - N)))
    bp = b.reshape(1, N)
    bp = bp if Np == N else jnp.pad(bp, ((0, 0), (0, Np - N)))

    out = pl.pallas_call(
        functools.partial(_linear_kernel, use_bf16=use_bf16),
        grid=(Mp // tm, Np // tn, Kp // tk),
        in_specs=[pl.BlockSpec((tm, tk), lambda i, j, k: (i, k)),
                  pl.BlockSpec((tk, tn), lambda i, j, k: (k, j)),
                  pl.BlockSpec((1, tn), lambda i, j, k: (0, j))],
        out_specs=pl.BlockSpec((tm, tn), lambda i, j, k: (i, j)),
        out_shape=jax.ShapeDtypeStruct((Mp, Np), x2d.dtype),
        scratch_shapes=[pltpu.VMEM((tm, tn), jnp.float32)],
        compiler_params=pltpu.CompilerParams(
            dimension_semantics=("parallel", "parallel", "arbitrary"),
            vmem_limit_bytes=_VMEM_LIMIT),
    )(xp, wp, bp)
    return out[:M, :N]


# ------------------------------ fused attention ------------------------------ #

def _attn_math(q, k, v, m, *, scale, use_bf16, approx_recip):
    # q, k, v: (Hc, n, hd); m: (1, n) additive f32 mask (0 valid / -inf padded).
    qs = q.astype(jnp.float32) * scale
    if use_bf16:
        qs = qs.astype(jnp.bfloat16)
        k = k.astype(jnp.bfloat16)
        v = v.astype(jnp.bfloat16)
    # Batched QK^T contracting the last dims (no explicit transpose / XLU copy).
    s = lax.dot_general(qs, k, (((2,), (2,)), ((0,), (0,))),
                        preferred_element_type=jnp.float32)          # (Hc, n_q, n_k) f32
    s = s + m[None].astype(jnp.float32)                              # mask add in f32
    # Softmax in f32.  Finite clamp + denom floor make fully-padded rows produce zeros
    # instead of NaN (costs two VPU selects, never changes valid rows).
    s_max = jnp.maximum(jnp.max(s, axis=-1, keepdims=True), -1e30)
    p = jnp.exp(s - s_max)
    denom = jnp.maximum(jnp.sum(p, axis=-1, keepdims=True), 1e-30)
    attn = p * pl.reciprocal(denom, approx=approx_recip)
    pv = attn.astype(v.dtype) if use_bf16 else attn                  # bf16 PV operand
    o = lax.dot_general(pv, v, (((2,), (1,)), ((0,), (0,))),
                        preferred_element_type=jnp.float32)          # (Hc, n_q, hd) f32
    return o, attn


def _attention_kernel_w(q_ref, k_ref, v_ref, m_ref, o_ref, w_ref, *, scale, use_bf16,
                        approx_recip):
    o, attn = _attn_math(q_ref[...], k_ref[...], v_ref[...], m_ref[...],
                         scale=scale, use_bf16=use_bf16, approx_recip=approx_recip)
    o_ref[...] = o.astype(o_ref.dtype)
    w_ref[...] = attn.astype(w_ref.dtype)


def _attention_kernel(q_ref, k_ref, v_ref, m_ref, o_ref, *, scale, use_bf16, approx_recip):
    o, _ = _attn_math(q_ref[...], k_ref[...], v_ref[...], m_ref[...],
                      scale=scale, use_bf16=use_bf16, approx_recip=approx_recip)
    o_ref[...] = o.astype(o_ref.dtype)


def _pick_head_chunk(num_heads, n, bsz, need_weights, vmem_limit):
    """Heads per grid step: bound the resident f32 (Hc, n, n) score/prob block (plus the
    optional weight writeback) to a fraction of the scoped VMEM budget, and split heads
    for tiny batches so both v7x TensorCores get work."""
    per_head = n * n * 4 * (4 if need_weights else 2)
    budget = max(vmem_limit // 4, 1 << 20)
    hc = max(1, min(num_heads, budget // max(per_head, 1)))
    if bsz < 2 and num_heads > 1:
        hc = min(hc, max(1, num_heads // 2))
    while num_heads % hc:
        hc -= 1
    return int(hc)


def attention_pallas(qkv5, add_mask, *, need_weights=True, use_bf16=True):
    """qkv5: (3, bsz, H, n, hd) packed projections; add_mask: (bsz, 1, n) additive f32.

    Grid = (bsz, H // Hc), both axes "parallel".  The packed tensor is passed once;
    three BlockSpecs select the q/k/v plane via their index_map, so no separate q/k/v
    slices are materialised in HBM."""
    _, bsz, H, n, hd = qkv5.shape
    scale = 8.0 / hd  # exact torch semantics: q * (8.0 / E); equals 1/sqrt(E) only at E==64.
    hc = _pick_head_chunk(H, n, bsz, need_weights, _VMEM_LIMIT)
    grid = (bsz, H // hc)

    def plane_spec(p):
        return pl.BlockSpec((None, None, hc, n, hd), lambda b, h, p=p: (p, b, h, 0, 0))

    in_specs = [plane_spec(0), plane_spec(1), plane_spec(2),
                pl.BlockSpec((None, 1, n), lambda b, h: (b, 0, 0))]
    o_spec = pl.BlockSpec((None, hc, n, hd), lambda b, h: (b, h, 0, 0))
    o_shape = jax.ShapeDtypeStruct((bsz, H, n, hd), qkv5.dtype)
    cp = pltpu.CompilerParams(dimension_semantics=("parallel", "parallel"),
                              vmem_limit_bytes=_VMEM_LIMIT)

    if need_weights:
        # TODO(synk): optionally emit the O(n^2) weights in bf16 to halve the writeback.
        out, attn_w = pl.pallas_call(
            functools.partial(_attention_kernel_w, scale=scale, use_bf16=use_bf16,
                              approx_recip=False),
            grid=grid,
            in_specs=in_specs,
            out_specs=[o_spec, pl.BlockSpec((None, hc, n, n), lambda b, h: (b, h, 0, 0))],
            out_shape=[o_shape, jax.ShapeDtypeStruct((bsz, H, n, n), qkv5.dtype)],
            compiler_params=cp,
        )(qkv5, qkv5, qkv5, add_mask)
        return out, attn_w

    out = pl.pallas_call(
        functools.partial(_attention_kernel, scale=scale, use_bf16=use_bf16,
                          approx_recip=True),   # EUP vrcp: free slot on the fast path
        grid=grid,
        in_specs=in_specs,
        out_specs=o_spec,
        out_shape=o_shape,
        compiler_params=cp,
    )(qkv5, qkv5, qkv5, add_mask)
    return out, None


# --------------------------- SelfAttention forward -------------------------- #

def make_params(key, embed_dim, num_heads, dtype=jnp.float32):
    """Xavier-uniform weights (as in _reset_parameters).  Weights are also stored
    pre-transposed (in, out) for the kernels so no per-forward transpose copy is made.
    Biases are small random values so the bias path is exercised numerically."""
    k1, k2, k3, k4 = jax.random.split(key, 4)

    def xavier(k, out_f, in_f):
        bound = np.sqrt(6.0 / (in_f + out_f))
        return jax.random.uniform(k, (out_f, in_f), dtype=dtype,
                                  minval=-bound, maxval=bound)

    in_w = xavier(k1, 3 * embed_dim, embed_dim)    # (3d, d) torch layout
    out_w = xavier(k2, embed_dim, embed_dim)       # (d, d)
    in_b = 0.1 * jax.random.normal(k3, (3 * embed_dim,), dtype)
    out_b = 0.1 * jax.random.normal(k4, (embed_dim,), dtype)
    return {
        "in_proj_w": in_w, "in_proj_w_t": in_w.T, "in_proj_b": in_b,
        "out_proj_w": out_w, "out_proj_w_t": out_w.T, "out_proj_b": out_b,
        "num_heads": num_heads, "embed_dim": embed_dim,
    }


def self_attention_forward(params, x, key_padding_mask=None, need_weights=True,
                           use_bf16=True):
    """x: (n, bsz, embed_dim).  Returns (output (n, bsz, d), attn (bsz, H, n, n) or None)."""
    n, bsz, d = x.shape
    H = params["num_heads"]
    hd = d // H

    # in_proj (tiled Pallas matmul, pre-transposed weight, bf16 MXU operands)
    qkv = linear_pallas(x.reshape(n * bsz, d), params["in_proj_w_t"],
                        params["in_proj_b"], use_bf16=use_bf16)

    # (n*bsz, 3d) -> (3, bsz, H, n, hd): one layout transpose so the attention blocks have
    # (n, hd) as their last two dims (full-extent => lane/sublane-legal).  The packed
    # tensor is passed once to the attention kernel; q/k/v planes are selected by index_map.
    qkv5 = qkv.reshape(n, bsz, 3, H, hd).transpose(2, 1, 3, 0, 4)

    # additive mask kept at (bsz, 1, n) f32 -- NOT duplicated per head in HBM.
    if key_padding_mask is not None:
        add_mask = jnp.where(key_padding_mask, -jnp.inf, 0.0).astype(jnp.float32)[:, None, :]
    else:
        add_mask = jnp.zeros((bsz, 1, n), jnp.float32)

    attn_out, attn_w = attention_pallas(qkv5, add_mask, need_weights=need_weights,
                                        use_bf16=use_bf16)

    # merge heads: (bsz, H, n, hd) -> (n*bsz, d)
    # TODO(synk): fold into the attention out_spec (lane-dense (n, d) block) when hd >= 128.
    out_flat = attn_out.transpose(2, 0, 1, 3).reshape(n * bsz, d)

    # out_proj (tiled Pallas matmul)
    out = linear_pallas(out_flat, params["out_proj_w_t"], params["out_proj_b"],
                        use_bf16=use_bf16)
    return out.reshape(n, bsz, d), attn_w


# ------------------------------ pure-JAX reference -------------------------- #

def self_attention_reference(params, x, key_padding_mask=None):
    n, bsz, d = x.shape
    H = params["num_heads"]
    hd = d // H
    qkv = x.reshape(n * bsz, d) @ params["in_proj_w"].T + params["in_proj_b"]
    qkv = qkv.reshape(n, bsz, 3 * d)
    q, k, v = jnp.split(qkv, 3, axis=-1)
    sh = lambda t: t.reshape(n, bsz * H, hd).transpose(1, 0, 2)
    q, k, v = sh(q), sh(k), sh(v)
    q = q * (8.0 / hd)
    s = jnp.einsum("bij,bkj->bik", q, k)
    if key_padding_mask is not None:
        m = jnp.where(key_padding_mask, -jnp.inf, 0.0)
        m = jnp.broadcast_to(m[:, None, None, :], (bsz, H, 1, n)).reshape(bsz * H, 1, n)
        s = s + m
    attn = jax.nn.softmax(s, axis=-1)
    o = jnp.einsum("bik,bkj->bij", attn, v)
    o = o.transpose(1, 0, 2).reshape(n * bsz, d)
    o = o @ params["out_proj_w"].T + params["out_proj_b"]
    return o.reshape(n, bsz, d), attn.reshape(bsz, H, n, n)


# ----------------------------------- main ----------------------------------- #

if __name__ == "__main__":
    n, bsz, embed_dim, num_heads = 8, 2, 32, 2  # head_dim = 16

    root = jax.random.PRNGKey(0)
    k_param, k_x = jax.random.split(root)
    params = make_params(k_param, embed_dim, num_heads)

    x = jax.random.normal(k_x, (n, bsz, embed_dim), dtype=jnp.float32)
    # key_padding_mask (bsz, n): last two keys of batch 1 are padded.
    key_padding_mask = jnp.zeros((bsz, n), dtype=bool).at[1, -2:].set(True)

    out_ref, attn_ref = self_attention_reference(params, x, key_padding_mask)

    # 1) default bf16-MXU path, masked, with attention weights (loose tolerance: bf16 inputs)
    out, attn_w = self_attention_forward(params, x, key_padding_mask)
    out = jax.block_until_ready(out)
    attn_w = jax.block_until_ready(attn_w)
    np.testing.assert_allclose(np.asarray(out), np.asarray(out_ref), rtol=5e-2, atol=5e-2)
    np.testing.assert_allclose(np.asarray(attn_w), np.asarray(attn_ref), rtol=5e-2, atol=5e-2)

    # 2) bf16 fast path that skips the (bsz, H, n, n) weight writeback (approx reciprocal)
    out_nw, _ = self_attention_forward(params, x, key_padding_mask, need_weights=False)
    out_nw = jax.block_until_ready(out_nw)
    np.testing.assert_allclose(np.asarray(out_nw), np.asarray(out_ref), rtol=5e-2, atol=5e-2)

    # 3) f32 path: verifies kernel structure bit-tightly
    out_f32, attn_f32 = self_attention_forward(params, x, key_padding_mask, use_bf16=False)
    out_f32 = jax.block_until_ready(out_f32)
    np.testing.assert_allclose(np.asarray(out_f32), np.asarray(out_ref), rtol=1e-3, atol=1e-3)
    np.testing.assert_allclose(np.asarray(attn_f32), np.asarray(attn_ref), rtol=1e-3, atol=1e-3)

    # 4) unmasked path (f32, tight)
    out_nm, attn_nm = self_attention_forward(params, x, None, use_bf16=False)
    out_nm = jax.block_until_ready(out_nm)
    out_nm_ref, attn_nm_ref = self_attention_reference(params, x, None)
    np.testing.assert_allclose(np.asarray(out_nm), np.asarray(out_nm_ref), rtol=1e-3, atol=1e-3)
    np.testing.assert_allclose(np.asarray(attn_nm), np.asarray(attn_nm_ref), rtol=1e-3, atol=1e-3)

    assert out.shape == (n, bsz, embed_dim)
    assert attn_w.shape == (bsz, num_heads, n, n)
    print("KERNEL_OK")
</pallas_src>

<mosaic_0001>
module attributes {stable_mosaic.version = 11 : i64} {
  func.func @_linear_kernel(%arg0: i32, %arg1: i32, %arg2: i32, %arg3: memref<16x32xf32, #tpu.memory_space<vmem>>, %arg4: memref<32x96xf32, #tpu.memory_space<vmem>>, %arg5: memref<1x96xf32, #tpu.memory_space<vmem>>, %arg6: memref<16x96xf32, #tpu.memory_space<vmem>>, %arg7: memref<16x96xf32, #tpu.memory_space<vmem>>) attributes {dimension_semantics = [#tpu.dimension_semantics<parallel>, #tpu.dimension_semantics<parallel>, #tpu.dimension_semantics<arbitrary>], iteration_bounds = array<i64: 1, 1, 1>, scalar_prefetch = 0 : i64, scratch_operands = 1 : i64, tpu.core_type = #tpu.core_type<tc>, window_params = [{transform_indices = @transform_0, window_bounds = array<i64: 16, 32>}, {transform_indices = @transform_1, window_bounds = array<i64: 32, 96>}, {transform_indices = @transform_2, window_bounds = array<i64: 1, 96>}, {transform_indices = @transform_3, window_bounds = array<i64: 16, 96>}]} {
    %c0_i32 = arith.constant 0 : i32
    %0 = arith.cmpi eq, %arg2, %c0_i32 : i32
    %1 = arith.extui %0 : i1 to i32
    %c0_i32_0 = arith.constant 0 : i32
    %2 = arith.cmpi ne, %1, %c0_i32_0 : i32
    scf.if %2 {
      %cst_10 = arith.constant 0.000000e+00 : f32
      %14 = vector.broadcast %cst_10 : f32 to vector<16x96xf32>
      %c0_11 = arith.constant 0 : index
      %c0_12 = arith.constant 0 : index
      %15 = vector.load %arg7[%c0_11, %c0_12] : memref<16x96xf32, #tpu.memory_space<vmem>>, vector<16x96xf32>
      tpu.vector_store %arg7[%c0_11, %c0_12], %14 {strides = array<i32>} : memref<16x96xf32, #tpu.memory_space<vmem>>, vector<16x96xf32>,
    } else {
    }
    %c0 = arith.constant 0 : index
    %c0_1 = arith.constant 0 : index
    %3 = vector.load %arg3[%c0, %c0_1] : memref<16x32xf32, #tpu.memory_space<vmem>>, vector<16x32xf32>
    %c0_2 = arith.constant 0 : index
    %c0_3 = arith.constant 0 : index
    %4 = vector.load %arg4[%c0_2, %c0_3] : memref<32x96xf32, #tpu.memory_space<vmem>>, vector<32x96xf32>
    %5 = arith.truncf %3 : vector<16x32xf32> to vector<16x32xbf16>
    %6 = arith.truncf %4 : vector<32x96xf32> to vector<32x96xbf16>
    %c0_4 = arith.constant 0 : index
    %c0_5 = arith.constant 0 : index
    %7 = vector.load %arg7[%c0_4, %c0_5] : memref<16x96xf32, #tpu.memory_space<vmem>>, vector<16x96xf32>
    %cst = arith.constant dense<0.000000e+00> : vector<16x96xf32>
    %8 = tpu.matmul %5, %6, %cst {dimension_numbers = #tpu.dot_dimension_numbers<[1], [0], [0], [1], [0, 0, 1, 1], [], []>} : vector<16x32xbf16>, vector<32x96xbf16>, vector<16x96xf32> -> vector<16x96xf32>
    %9 = arith.addf %7, %8 : vector<16x96xf32>
    %c0_6 = arith.constant 0 : index
    %c0_7 = arith.constant 0 : index
    %10 = vector.load %arg7[%c0_6, %c0_7] : memref<16x96xf32, #tpu.memory_space<vmem>>, vector<16x96xf32>
    tpu.vector_store %arg7[%c0_6, %c0_7], %9 {strides = array<i32>} : memref<16x96xf32, #tpu.memory_space<vmem>>, vector<16x96xf32>,
    %c0_i32_8 = arith.constant 0 : i32
    %11 = arith.cmpi eq, %arg2, %c0_i32_8 : i32
    %12 = arith.extui %11 : i1 to i32
    %c0_i32_9 = arith.constant 0 : i32
    %13 = arith.cmpi ne, %12, %c0_i32_9 : i32
    scf.if %13 {
      %c0_10 = arith.constant 0 : index
      %c0_11 = arith.constant 0 : index
      %14 = vector.load %arg7[%c0_10, %c0_11] : memref<16x96xf32, #tpu.memory_space<vmem>>, vector<16x96xf32>
      %c0_12 = arith.constant 0 : index
      %c0_13 = arith.constant 0 : index
      %15 = vector.load %arg5[%c0_12, %c0_13] : memref<1x96xf32, #tpu.memory_space<vmem>>, vector<1x96xf32>
      %16 = vector.broadcast %15 : vector<1x96xf32> to vector<16x96xf32>
      %17 = arith.addf %14, %16 : vector<16x96xf32>
      %c0_14 = arith.constant 0 : index
      %c0_15 = arith.constant 0 : index
      %18 = vector.load %arg6[%c0_14, %c0_15] : memref<16x96xf32, #tpu.memory_space<vmem>>, vector<16x96xf32>
      tpu.vector_store %arg6[%c0_14, %c0_15], %17 {strides = array<i32>} : memref<16x96xf32, #tpu.memory_space<vmem>>, vector<16x96xf32>,
    } else {
    }
    return
  }
  func.func @transform_0(%arg0: i32, %arg1: i32, %arg2: i32) -> (i32, i32) {
    %c0_i32 = arith.constant 0 : i32
    return %arg0, %arg2 : i32, i32
  }
  func.func @transform_1(%arg0: i32, %arg1: i32, %arg2: i32) -> (i32, i32) {
    %c0_i32 = arith.constant 0 : i32
    return %arg2, %arg1 : i32, i32
  }
  func.func @transform_2(%arg0: i32, %arg1: i32, %arg2: i32) -> (i32, i32) {
    %c0_i32 = arith.constant 0 : i32
    %c0_i32_0 = arith.constant 0 : i32
    return %c0_i32, %arg1 : i32, i32
  }
  func.func @transform_3(%arg0: i32, %arg1: i32, %arg2: i32) -> (i32, i32) {
    %c0_i32 = arith.constant 0 : i32
    return %arg0, %arg1 : i32, i32
  }
}

</mosaic_0001>

<llo_original>
// kernel: tpu_custom_call.1
$region0: #{tpu_custom_call.1}
  #allocation0 [shape = 'u32[]', space=smem, size = 0x4, offset = 0x4, fixed_abs, tag = 'smem constant byte address 0x4 - core index']
  #allocation1 [shape = 'u32[144,128]{1,0:T(1,128)}', space=vmem, size = 0x12000, scoped, tag = 'internal scratch']
  #allocation2 [shape = 'f32[16,96]{1,0:T(8,128)}', space=vmem, size = 0x2000, scoped, tag = 'scratch operand']
  %s0 = inlined_call_operand.hbm [shape: f32[16,32], index: 0, kind: input, shape index: {}]
  %s1 = inlined_call_operand.hbm [shape: f32[32,96], index: 1, kind: input, shape index: {}]
  %s2 = inlined_call_operand.vmem [shape: f32[1,96], index: 2, kind: input, shape index: {}]
  %s3 = inlined_call_operand.hbm [shape: f32[16,96], index: 3, kind: output, shape index: {}]
  %s4 = sld [smem:[#allocation0]]
  $region38: #{tpu_custom_call.1} parent=0
    _
  %s6 = ssub.s32 1, %s4
  %s7 = scalar_select 0, %s6, %s4
  $region1: #{tpu_custom_call.1} parent=0
    #allocation3 [shape = 'u8[8192]{0}', space=vmem, size = 0x2000, scoped, tag = 'input window, operand 0, single buffered']
    #allocation4 [shape = 's32[1]{0}', space=sflag, size = 0x4, scoped, tag = 'scoped memory for tpu_custom_call.1']
    #allocation5 [shape = 's32[1]{0}', space=sflag, size = 0x4, scoped, tag = 'scoped memory for tpu_custom_call.1']
    #allocation6 [shape = 'u8[16384]{0}', space=vmem, size = 0x4000, scoped, tag = 'input window, operand 1, single buffered']
    #allocation7 [shape = 's32[1]{0}', space=sflag, size = 0x4, scoped, tag = 'scoped memory for tpu_custom_call.1']
    #allocation8 [shape = 'u8[8192]{0}', space=vmem, size = 0x2000, scoped, tag = 'output window, operand 0, single buffered']
    %8 = vsyncpa [#allocation4], 0
    %9 = vsyncpa [#allocation7], 0
    %10 = vsyncpa [#allocation5], 0
    // Predicated region
    $region2: #{tpu_custom_call.1} parent=1 // pred_check
      _
    $region3: #{tpu_custom_call.1} parent=1 // pred_check_branch
      %12 = sbr.rel (0) target = $region5
    $region4: #{tpu_custom_call.1} parent=1 // pred_region
      %s14 = ssub.s32 256, 256
      %15 = vsyncadd [#allocation4], %s14
      %s16 = sshll.u32 [#allocation3], 4
      %s17 = int_to_ptr.vmem [resolvable:$true] %s16
      %22 = dma.hbm_to_vmem [thread:$0]  %s0, 256, %s17, [#allocation4], 128, 128, 8
    $region5: #{tpu_custom_call.1} parent=1 // pred_fallthru
      _
    // Predicated region
    $region6: #{tpu_custom_call.1} parent=1 // pred_check
      _
    $region7: #{tpu_custom_call.1} parent=1 // pred_check_branch
      %24 = sbr.rel (0) target = $region9
    $region8: #{tpu_custom_call.1} parent=1 // pred_region
      %s26 = ssub.s32 512, 512
      %27 = vsyncadd [#allocation7], %s26
      %s28 = sshll.u32 [#allocation6], 4
      %s29 = int_to_ptr.vmem [resolvable:$true] %s28
      %34 = dma.hbm_to_vmem [thread:$0]  %s1, 512, %s29, [#allocation7], 128, 128, 8
    $region9: #{tpu_custom_call.1} parent=1 // pred_fallthru
      _
    // Predicated region
    $region10: #{tpu_custom_call.1} parent=1 // pred_check
      _
    $region11: #{tpu_custom_call.1} parent=1 // pred_check_branch
      %36 = sbr.rel (0) target = $region13
    $region12: #{tpu_custom_call.1} parent=1 // pred_region
      _
    $region13: #{tpu_custom_call.1} parent=1 // pred_fallthru
      _
    // Predicated region
    $region14: #{tpu_custom_call.1} parent=1 // pred_check
      _
    $region15: #{tpu_custom_call.1} parent=1 // pred_check_branch
      %38 = sbr.rel (0) target = $region17
    $region16: #{tpu_custom_call.1} parent=1 // pred_region
      %39 = dma.done [#allocation4], 256
    $region17: #{tpu_custom_call.1} parent=1 // pred_fallthru
      _
    // Predicated region
    $region18: #{tpu_custom_call.1} parent=1 // pred_check
      _
    $region19: #{tpu_custom_call.1} parent=1 // pred_check_branch
      %41 = sbr.rel (0) target = $region21
    $region20: #{tpu_custom_call.1} parent=1 // pred_region
      %42 = dma.done [#allocation7], 512
    $region21: #{tpu_custom_call.1} parent=1 // pred_fallthru
      _
    %p44 = scmp.eq.s32.totalorder 0, 0
    // Predicated region
    $region22: #{tpu_custom_call.1} parent=1 // pred_check
      %p45 = pneg %p44
    $region23: #{tpu_custom_call.1} parent=1 // pred_check_branch
      %47 = sbr.rel (%p45) target = $region25
    $region24: #{tpu_custom_call.1} parent=1 // pred_region
      %vm48 = vcmask 785408
      %49 = vst.msk [vmem:[#allocation2] sm:$0xff] %vm48, 0.0
      %50 = vst.msk [vmem:[#allocation2 + $0x8] sm:$0xff] %vm48, 0.0
    $region25: #{tpu_custom_call.1} parent=1 // pred_fallthru
      _
    %v51 = vld [vmem:[#allocation3] sm:$0xff]
    %v52 = vld [vmem:[#allocation3 + $0x8] sm:$0xff]
    %v53 = vld [vmem:[#allocation6] sm:$0xff]
    %v54 = vld [vmem:[#allocation6 + $0x8] sm:$0xff]
    %v55 = vld [vmem:[#allocation6 + $0x10] sm:$0xff]
    %v56 = vld [vmem:[#allocation6 + $0x18] sm:$0xff]
    %v57 = vpack.c.bf16 %v52, %v51
    %v58 = vpack.c.bf16 %v54, %v53
    %v59 = vpack.c.bf16 %v56, %v55
    %v60 = vld [vmem:[#allocation2] sm:$0xff]
    %v61 = vld [vmem:[#allocation2 + $0x8] sm:$0xff]
    %vm62 = vcmask 261120
    %v64 = vsel %vm62, %v57, 0
    %66 = vmatprep.subr.bf16.mxu0 0
    %67 = vmatpush1.bf16.msra.mxu0 0
    %68 = vmatprep.subr.bf16.mxu0 0
    %69 = vmatpush1.bf16.msra.mxu0 0
    %70 = vmatprep.subr.bf16.mxu0 0
    %71 = vmatpush1.bf16.msra.mxu0 0
    %72 = vmatprep.subr.bf16.mxu0 0
    %73 = vmatpush1.bf16.msra.mxu0 0
    %74 = vmatprep.subr.bf16.mxu0 0
    %75 = vmatpush1.bf16.msra.mxu0 0
    %76 = vmatprep.subr.bf16.mxu0 0
    %77 = vmatpush1.bf16.msra.mxu0 0
    %78 = vmatprep.subr.bf16.mxu0 0
    %79 = vmatpush1.bf16.msra.mxu0 %v59
    %80 = vmatprep.subr.bf16.mxu0 0
    %81 = vmatpush1.bf16.msra.mxu0 %v58
    %82 = vmatprep.subr.bf16.mxu0 0
    %83 = vmatpush2.bf16.msra.mxu0 0
    %84 = vmatprep.subr.bf16.mxu0 0
    %85 = vmatpush2.bf16.msra.mxu0 0
    %86 = vmatprep.subr.bf16.mxu0 0
    %87 = vmatpush2.bf16.msra.mxu0 0
    %88 = vmatprep.subr.bf16.mxu0 0
    %89 = vmatpush2.bf16.msra.mxu0 0
    %90 = vmatprep.subr.bf16.mxu0 0
    %91 = vmatpush2.bf16.msra.mxu0 0
    %92 = vmatprep.subr.bf16.mxu0 0
    %93 = vmatpush2.bf16.msra.mxu0 0
    %94 = vmatprep.subr.bf16.mxu0 0
    %95 = vmatpush2.bf16.msra.mxu0 0
    %96 = vmatprep.subr.bf16.mxu0 0
    %97 = vmatpush2.bf16.msra.mxu0 0
    %98 = vmatprep.mubr.bf16.mxu0 0
    %99 = vmatmul.mubr.bf16.gmra.mxu0 %v64
    %v100 = vpop.f32.mrf.mxu0
    %v101 = vadd.f32 0.0, %v100
    %v102 = vpop.f32.mrf.mxu0
    %v103 = vpop.f32.mrf.mxu0
    %v104 = vadd.f32 0.0, %v103
    %v105 = vpop.f32.mrf.mxu0
    %106 = vdwg.mxu0
    %v107 = vadd.f32 %v60, %v101
    %v108 = vadd.f32 %v61, %v104
    %vm109 = vcmask 785408
    %110 = vst.msk [vmem:[#allocation2] sm:$0xff] %vm109, %v107
    %111 = vst.msk [vmem:[#allocation2 + $0x8] sm:$0xff] %vm109, %v108
    // Predicated region
    $region26: #{tpu_custom_call.1} parent=1 // pred_check
      %p112 = pneg %p44
    $region27: #{tpu_custom_call.1} parent=1 // pred_check_branch
      %114 = sbr.rel (%p112) target = $region29
    $region28: #{tpu_custom_call.1} parent=1 // pred_region
      %v115 = vld [vmem:[#allocation2] sm:$0xff]
      %v116 = vld [vmem:[#allocation2 + $0x8] sm:$0xff]
      %v117 = vld [vmem:[%s2] sm:$0x1]
      %v119 = vlaneseq
      %v120 = vshrl.u32 %v119, 7
      %v121 = vsub.s32 0, %v120
      %v122 = vrot.slane %v117, %v121
      %v124 = vadd.f32 %v115, %v122
      %v125 = vadd.f32 %v116, %v122
      %126 = vst.msk [vmem:[#allocation8] sm:$0xff] %vm109, %v124
      %127 = vst.msk [vmem:[#allocation8 + $0x8] sm:$0xff] %vm109, %v125
    $region29: #{tpu_custom_call.1} parent=1 // pred_fallthru
      _
    // Predicated region
    $region30: #{tpu_custom_call.1} parent=1 // pred_check
      _
    $region31: #{tpu_custom_call.1} parent=1 // pred_check_branch
      %129 = sbr.rel (0) target = $region33
    $region32: #{tpu_custom_call.1} parent=1 // pred_region
      %s131 = ssub.s32 256, 256
      %132 = vsyncadd [#allocation5], %s131
      %s133 = sshll.u32 [#allocation8], 4
      %s134 = int_to_ptr.vmem [resolvable:$true] %s133
      %139 = dma.vmem_to_hbm [thread:$0]  %s134, 256, %s3, [#allocation5], 128, 128, 8
    $region33: #{tpu_custom_call.1} parent=1 // pred_fallthru
      _
    // Predicated region
    $region34: #{tpu_custom_call.1} parent=1 // pred_check
      _
    $region35: #{tpu_custom_call.1} parent=1 // pred_check_branch
      %141 = sbr.rel (0) target = $region37
    $region36: #{tpu_custom_call.1} parent=1 // pred_region
      %142 = dma.done [#allocation5], 256
    $region37: #{tpu_custom_call.1} parent=1 // pred_fallthru
      _
    %143 = vsyncpa [#allocation4], 1
    %144 = vsyncpa [#allocation7], 1
    %145 = vsyncpa [#allocation5], 1

</llo_original>
